<compile_context>
chip_gen: v6e
topology: v6e:2x2x1
jax: 0.10.0
libtpu: 0.0.40
codegen_flags: <defaults>
</compile_context>

<pallas_src>
import math
from functools import partial

import jax
import jax.numpy as jnp
from jax.experimental import pallas as pl
from jax.experimental.pallas import tpu as pltpu

EPS = 1e-5  # torch.nn.LayerNorm default


# ---------------------------------------------------------------------------
# Kernel
# ---------------------------------------------------------------------------
def pe3d_kernel(csb_ref, x_ref, wpk_ref, w2t_ref, bias_ref, out_ref):
    """One grid step: (Bt, 3, S) detector coords -> (Bt, D, S) features."""
    bt, _, S = x_ref.shape
    D = out_ref.shape[1]
    n1 = float(3 * S)
    n2 = float(D * S)

    # Grid-invariant tiny operands, loaded once (hoisted out of the loop).
    csb = csb_ref[...]                     # (3, 2): [:,0]=coord scale, [:,1]=coord shift
    cs = csb[:, 0:1]                       # (3, 1)
    cb = csb[:, 1:2]                       # (3, 1)
    wpk = wpk_ref[...]                     # (D, 4): [:, :3]=w1_det^T, [:, 3:4]=b1_det
    w2t = w2t_ref[...]                     # (D, D): softmax(cw)[0] * w2_det^T

    def one_sample(b, carry):
        x = x_ref[b]                                           # (3, S)

        # DetectorPositionalEncoding3D: per-channel affine on the full slab.
        r = x * cs + cb                                        # (3, S)

        # LayerNorm([3,Z,H,W]) stats, two-pass, f32 (identity affine folded).
        mu1 = jnp.sum(r, keepdims=True) / n1                   # (1, 1)
        c1 = r - mu1
        inv1 = jax.lax.rsqrt(jnp.sum(c1 * c1, keepdims=True) / n1 + EPS)

        # conv1 (K=3) as three broadcast madds on the VPU; LN1's inv1 folded
        # into the post-sum scale (normalized (3,S) tensor never materialized).
        p = (wpk[:, 0:1] * c1[0:1, :]
             + wpk[:, 1:2] * c1[1:2, :]
             + wpk[:, 2:3] * c1[2:3, :])                       # (D, S)
        h = inv1 * p + wpk[:, 3:4]                             # (D, S)

        # LayerNorm([D,Z,H,W]) + ReLU; inv2 > 0 commutes with ReLU, so it is
        # applied once after the matmul instead of across the (D,S) activation.
        mu2 = jnp.sum(h, keepdims=True) / n2
        c2 = h - mu2
        inv2 = jax.lax.rsqrt(jnp.sum(c2 * c2, keepdims=True) / n2 + EPS)
        a = jnp.maximum(c2, 0.0)

        # conv2(detector) + softmax-weighted combine with the precomputed
        # sinusoidal branch, fused:
        #   o = inv2 * ((cw0*w2d^T) @ relu(c2)) + (cw0*b2d + cw1*sin_feat)
        o = jnp.dot(w2t, a, preferred_element_type=jnp.float32)
        o = o * inv2 + bias_ref[...]                           # (D, S)

        # Final LayerNorm (identity affine), two-pass stats.
        mu3 = jnp.sum(o, keepdims=True) / n2
        c3 = o - mu3
        inv3 = jax.lax.rsqrt(jnp.sum(c3 * c3, keepdims=True) / n2 + EPS)
        out_ref[b] = (c3 * inv3).astype(out_ref.dtype)
        return carry

    # TODO(synk): for large S (>~2k at D=32), tile S on an "arbitrary" grid
    # axis with a two-pass (stats, then normalize) LayerNorm instead.
    jax.lax.fori_loop(0, bt, one_sample, 0, unroll=True)


# ---------------------------------------------------------------------------
# Wrapper
# ---------------------------------------------------------------------------
def _pick_bt(B, D, S, budget_bytes=2 << 20):
    """Largest divisor of B whose (in+out) block fits the budget, keeping at
    least two grid steps when B >= 2 so both v7x TensorCores get work."""
    per_sample = (D + 3) * S * 4
    cap = max(1, budget_bytes // per_sample)
    if B >= 2:
        cap = min(cap, B // 2)
    bt = 1
    for c in range(1, B + 1):
        if B % c == 0 and c <= cap:
            bt = c
    return bt


@partial(jax.jit, static_argnums=(2, 3, 4))
def positional_encoding_3d(x_cf, prepared, Z, H, W):
    """x_cf: (B, 3, Z, H, W) f32 detector coords, stored channel-first upstream
    (no per-call transpose).  Returns (B, D, Z, H, W) f32 (PyTorch layout)."""
    csb, wpk, w2t, bias_comb = prepared
    B = x_cf.shape[0]
    D, S = bias_comb.shape
    assert x_cf.shape[1] == 3 and S == Z * H * W

    x2 = x_cf.reshape(B, 3, S)            # contiguous reshape, free
    bt = _pick_bt(B, D, S)

    # Right-sized VMEM request: double-buffered blocks + resident operands +
    # in-kernel temporaries + headroom; capped for v7x's 64 MiB VMEM.
    blocks = 4 * (bt * 3 * S + bt * D * S)            # x block + out block
    resident = 4 * (3 * 2 + D * 4 + D * D + D * S)    # csb, wpk, w2t, bias
    scratch = 4 * 4 * D * S                           # live (D, S) temporaries
    vmem_limit = 2 * (blocks + resident) + scratch + (2 << 20)
    vmem_limit = int(max(16 << 20, min(vmem_limit, 48 << 20)))

    grid_spec = pltpu.PrefetchScalarGridSpec(
        num_scalar_prefetch=0,
        grid=(B // bt,),
        in_specs=[
            pl.BlockSpec((3, 2), lambda i: (0, 0)),           # cs | cb packed
            pl.BlockSpec((bt, 3, S), lambda i: (i, 0, 0)),    # x, channel-first
            pl.BlockSpec((D, 4), lambda i: (0, 0)),           # w1^T | b1 packed
            pl.BlockSpec((D, D), lambda i: (0, 0)),           # cw0 * w2_det^T
            pl.BlockSpec((D, S), lambda i: (0, 0)),           # fused bias (resident)
            # TODO(synk): on v7x, add pipeline_mode=pl.Buffered(1) to the four
            # grid-invariant operands above to avoid double-buffering the
            # resident (D,S) bias; omitted here for portability.
        ],
        out_specs=pl.BlockSpec((bt, D, S), lambda i: (i, 0, 0)),  # lanes = S (dense)
    )

    out = pl.pallas_call(
        pe3d_kernel,
        # TODO(synk): emit bf16 output (stats/accumulation stay f32) if the
        # consumer tolerates it -- halves the HBM write traffic that bounds
        # this kernel on v5e/v6e.
        out_shape=jax.ShapeDtypeStruct((B, D, S), jnp.float32),
        grid_spec=grid_spec,
        compiler_params=pltpu.CompilerParams(
            dimension_semantics=("parallel",),
            vmem_limit_bytes=vmem_limit,
        ),
    )(csb, x2, wpk, w2t, bias_comb)

    return out.reshape(B, D, Z, H, W)


# ---------------------------------------------------------------------------
# Parameter construction (mirrors the module's __init__, deterministic)
# ---------------------------------------------------------------------------
def _sin_table(n, D):
    pos = jnp.linspace(0.0, 1.0, n)
    div = jnp.exp(jnp.arange(0, D, 2, dtype=jnp.float32) * (-(math.log(10000.0) / D)))
    ang = pos[:, None] * div[None, :] * math.pi
    t = jnp.zeros((n, D), jnp.float32)
    t = t.at[:, 0::2].set(jnp.sin(ang))
    t = t.at[:, 1::2].set(jnp.cos(ang))
    return t


def build_pe_table(Z, H, W, D):
    """Sinusoidal table, channel-first: (3D, S)."""
    S = Z * H * W
    pez, peh, pew = _sin_table(Z, D), _sin_table(H, D), _sin_table(W, D)
    pe_last = jnp.concatenate(
        [
            jnp.broadcast_to(pez[:, None, None, :], (Z, H, W, D)),
            jnp.broadcast_to(peh[None, :, None, :], (Z, H, W, D)),
            jnp.broadcast_to(pew[None, None, :, :], (Z, H, W, D)),
        ],
        axis=-1,
    ).reshape(S, 3 * D)
    return pe_last.T                                            # (3D, S)


def build_raw_params(key, Z, H, W, D):
    """Raw module parameters (Conv weights random; LN affines = PyTorch default identity)."""
    ks = jax.random.split(key, 4)
    coord_ranges = jnp.array([[0.0, 4000.0], [0.0, 4000.0], [0.0, 2.0]], jnp.float32)
    scale_factors = jnp.ones((3,), jnp.float32)

    def conv_init(k, cin, cout):
        bound = 1.0 / math.sqrt(cin)
        kw, kb = jax.random.split(k)
        w = jax.random.uniform(kw, (cin, cout), jnp.float32, -bound, bound)
        b = jax.random.uniform(kb, (cout,), jnp.float32, -bound, bound)
        return w, b

    w1d, b1d = conv_init(ks[0], 3, D)
    w2d, b2d = conv_init(ks[1], D, D)
    w1s, b1s = conv_init(ks[2], 3 * D, D)
    w2s, b2s = conv_init(ks[3], D, D)
    combine = jnp.ones((2,), jnp.float32)

    return (coord_ranges, scale_factors, w1d, b1d, w2d, b2d,
            w1s, b1s, w2s, b2s, combine)


def prepare_params(raw, Z, H, W, D):
    """Batch-invariant precompute + folding. Runs ONCE (not per forward)."""
    (coord_ranges, scale_factors, w1d, b1d, w2d, b2d,
     w1s, b1s, w2s, b2s, combine) = raw

    lo, hi = coord_ranges[:, 0], coord_ranges[:, 1]
    cs = scale_factors * 2.0 / (hi - lo)
    cb = scale_factors * (-2.0 * lo / (hi - lo) - 1.0)
    csb = jnp.stack([cs, cb], axis=1).astype(jnp.float32)       # (3, 2)

    wpk = jnp.concatenate([w1d.T, b1d[:, None]], axis=1).astype(jnp.float32)  # (D, 4)

    # Sinusoidal branch (batch independent): conv1 -> LN -> ReLU -> conv2, once.
    pe_cf = build_pe_table(Z, H, W, D)                          # (3D, S)
    s = w1s.T @ pe_cf + b1s[:, None]                            # (D, S)
    mu = jnp.mean(s)
    var = jnp.mean(jnp.square(s - mu))
    s = jnp.maximum((s - mu) * jax.lax.rsqrt(var + EPS), 0.0)
    sin_feat = w2s.T @ s + b2s[:, None]                         # (D, S)

    cw = jax.nn.softmax(combine)
    w2t = (cw[0] * w2d.T).astype(jnp.float32)                   # (D, D)
    bias_comb = (cw[0] * b2d[:, None] + cw[1] * sin_feat).astype(jnp.float32)  # (D, S)

    # TODO(synk): trained (non-identity) LayerNorm affines are not representable
    # here; they would need extra (C, S) gamma/beta inputs applied after each
    # normalization (PyTorch default init is identity and is folded away).
    return csb, wpk, w2t, bias_comb


# ---------------------------------------------------------------------------
# Pure-JAX reference (mirrors the PyTorch forward; channel-first input layout)
# ---------------------------------------------------------------------------
def reference(x_cf, raw, Z, H, W, D):
    (coord_ranges, scale_factors, w1d, b1d, w2d, b2d,
     w1s, b1s, w2s, b2s, combine) = raw
    B = x_cf.shape[0]
    S = Z * H * W
    xT = x_cf.reshape(B, 3, S)                                  # (B, 3, S)

    lo, hi = coord_ranges[:, 0], coord_ranges[:, 1]
    cs = scale_factors * 2.0 / (hi - lo)
    cb = scale_factors * (-2.0 * lo / (hi - lo) - 1.0)

    def ln(v):  # normalize over everything but batch
        mu = jnp.mean(v, axis=(1, 2), keepdims=True)
        var = jnp.mean(jnp.square(v - mu), axis=(1, 2), keepdims=True)
        return (v - mu) * jax.lax.rsqrt(var + EPS)

    det = ln(xT * cs[None, :, None] + cb[None, :, None])        # (B, 3, S)
    h = jnp.einsum('kd,bks->bds', w1d, det) + b1d[None, :, None]
    h = jnp.maximum(ln(h), 0.0)
    det_feat = jnp.einsum('kd,bks->bds', w2d, h) + b2d[None, :, None]

    pe_cf = build_pe_table(Z, H, W, D)
    s = w1s.T @ pe_cf + b1s[:, None]
    mu = jnp.mean(s)
    var = jnp.mean(jnp.square(s - mu))
    s = jnp.maximum((s - mu) * jax.lax.rsqrt(var + EPS), 0.0)
    sin_feat = w2s.T @ s + b2s[:, None]

    cw = jax.nn.softmax(combine)
    combined = cw[0] * det_feat + cw[1] * sin_feat[None]
    return ln(combined).reshape(B, D, Z, H, W)


if __name__ == "__main__":
    B, Z, H, W, D = 2, 2, 16, 16, 32          # S = Z*H*W = 512 (multiple of 128)

    key = jax.random.PRNGKey(0)
    kx, kp = jax.random.split(key)

    # Upstream now stores detector coordinates channel-first (B, 3, Z, H, W),
    # eliminating the per-call stride-3 transpose the previous version needed.
    ranges = jnp.array([4000.0, 4000.0, 2.0], jnp.float32)
    x_cf = jax.random.uniform(kx, (B, 3, Z, H, W), jnp.float32) \
        * ranges[None, :, None, None, None]

    raw = build_raw_params(kp, Z, H, W, D)
    prepared = prepare_params(raw, Z, H, W, D)   # batch-invariant fold, runs once

    out = positional_encoding_3d(x_cf, prepared, Z, H, W)
    out = jax.block_until_ready(out)

    ref = reference(x_cf, raw, Z, H, W, D)
    assert out.shape == (B, D, Z, H, W)
    max_err = float(jnp.max(jnp.abs(out - ref)))
    assert max_err < 2e-3, max_err

    print("KERNEL_OK")
</pallas_src>

<mosaic_0001>
module attributes {stable_mosaic.version = 11 : i64} {
  func.func @pe3d_kernel(%arg0: i32, %arg1: memref<3x2xf32, #tpu.memory_space<vmem>>, %arg2: memref<1x3x512xf32, #tpu.memory_space<vmem>>, %arg3: memref<32x4xf32, #tpu.memory_space<vmem>>, %arg4: memref<32x32xf32, #tpu.memory_space<vmem>>, %arg5: memref<32x512xf32, #tpu.memory_space<vmem>>, %arg6: memref<1x32x512xf32, #tpu.memory_space<vmem>>) attributes {dimension_semantics = [#tpu.dimension_semantics<parallel>], iteration_bounds = array<i64: 2>, scalar_prefetch = 0 : i64, scratch_operands = 0 : i64, tpu.core_type = #tpu.core_type<tc>, window_params = [{pipeline_mode = #tpu.pipeline_mode<synchronous>, transform_indices = @transform_0, window_bounds = array<i64: 3, 2>}, {transform_indices = @transform_1, window_bounds = array<i64: 1, 3, 512>}, {pipeline_mode = #tpu.pipeline_mode<synchronous>, transform_indices = @transform_2, window_bounds = array<i64: 32, 4>}, {pipeline_mode = #tpu.pipeline_mode<synchronous>, transform_indices = @transform_3, window_bounds = array<i64: 32, 32>}, {pipeline_mode = #tpu.pipeline_mode<synchronous>, transform_indices = @transform_4, window_bounds = array<i64: 32, 512>}, {transform_indices = @transform_5, window_bounds = array<i64: 1, 32, 512>}]} {
    %c0 = arith.constant 0 : index
    %c0_0 = arith.constant 0 : index
    %0 = vector.load %arg1[%c0, %c0_0] : memref<3x2xf32, #tpu.memory_space<vmem>>, vector<3x2xf32>
    %1 = vector.extract_strided_slice %0 {offsets = [0, 0], sizes = [3, 1], strides = [1, 1]} : vector<3x2xf32> to vector<3x1xf32>
    %2 = vector.extract_strided_slice %0 {offsets = [0, 1], sizes = [3, 1], strides = [1, 1]} : vector<3x2xf32> to vector<3x1xf32>
    %c0_1 = arith.constant 0 : index
    %c0_2 = arith.constant 0 : index
    %3 = vector.load %arg3[%c0_1, %c0_2] : memref<32x4xf32, #tpu.memory_space<vmem>>, vector<32x4xf32>
    %c0_3 = arith.constant 0 : index
    %c0_4 = arith.constant 0 : index
    %4 = vector.load %arg4[%c0_3, %c0_4] : memref<32x32xf32, #tpu.memory_space<vmem>>, vector<32x32xf32>
    %c0_i32 = arith.constant 0 : i32
    %5 = arith.index_cast %c0_i32 : i32 to index
    %c0_5 = arith.constant 0 : index
    %c0_6 = arith.constant 0 : index
    %6 = vector.load %arg2[%5, %c0_5, %c0_6] : memref<1x3x512xf32, #tpu.memory_space<vmem>>, vector<1x3x512xf32>
    %7 = vector.shape_cast %6 : vector<1x3x512xf32> to vector<3x512xf32>
    %8 = vector.broadcast %1 : vector<3x1xf32> to vector<3x512xf32>
    %9 = arith.mulf %7, %8 : vector<3x512xf32>
    %10 = vector.broadcast %2 : vector<3x1xf32> to vector<3x512xf32>
    %11 = arith.addf %9, %10 : vector<3x512xf32>
    %12 = vector.shape_cast %11 : vector<3x512xf32> to vector<1x3x512xf32>
    %cst = arith.constant dense<0.000000e+00> : vector<1xf32>
    %13 = vector.multi_reduction <add>, %12, %cst [1, 2] : vector<1x3x512xf32> to vector<1xf32>
    %14 = vector.shape_cast %13 : vector<1xf32> to vector<1x1x1xf32>
    %15 = vector.extract %14[0, 0, 0] : f32 from vector<1x1x1xf32>
    %16 = vector.broadcast %15 : f32 to vector<1x1xf32>
    %cst_7 = arith.constant 1.536000e+03 : f32
    %17 = vector.broadcast %cst_7 : f32 to vector<1x1xf32>
    %18 = arith.divf %16, %17 : vector<1x1xf32>
    %19 = vector.broadcast %18 : vector<1x1xf32> to vector<3x512xf32>
    %20 = arith.subf %11, %19 : vector<3x512xf32>
    %21 = arith.mulf %20, %20 : vector<3x512xf32>
    %22 = vector.shape_cast %21 : vector<3x512xf32> to vector<1x3x512xf32>
    %cst_8 = arith.constant dense<0.000000e+00> : vector<1xf32>
    %23 = vector.multi_reduction <add>, %22, %cst_8 [1, 2] : vector<1x3x512xf32> to vector<1xf32>
    %24 = vector.shape_cast %23 : vector<1xf32> to vector<1x1x1xf32>
    %25 = vector.extract %24[0, 0, 0] : f32 from vector<1x1x1xf32>
    %26 = vector.broadcast %25 : f32 to vector<1x1xf32>
    %cst_9 = arith.constant 1.536000e+03 : f32
    %27 = vector.broadcast %cst_9 : f32 to vector<1x1xf32>
    %28 = arith.divf %26, %27 : vector<1x1xf32>
    %cst_10 = arith.constant 9.99999974E-6 : f32
    %29 = vector.broadcast %cst_10 : f32 to vector<1x1xf32>
    %30 = arith.addf %28, %29 : vector<1x1xf32>
    %31 = math.rsqrt %30 : vector<1x1xf32>
    %32 = vector.extract_strided_slice %3 {offsets = [0, 0], sizes = [32, 1], strides = [1, 1]} : vector<32x4xf32> to vector<32x1xf32>
    %33 = vector.extract_strided_slice %20 {offsets = [0, 0], sizes = [1, 512], strides = [1, 1]} : vector<3x512xf32> to vector<1x512xf32>
    %34 = vector.broadcast %32 : vector<32x1xf32> to vector<32x512xf32>
    %35 = vector.broadcast %33 : vector<1x512xf32> to vector<32x512xf32>
    %36 = arith.mulf %34, %35 : vector<32x512xf32>
    %37 = vector.extract_strided_slice %3 {offsets = [0, 1], sizes = [32, 1], strides = [1, 1]} : vector<32x4xf32> to vector<32x1xf32>
    %38 = vector.extract_strided_slice %20 {offsets = [1, 0], sizes = [1, 512], strides = [1, 1]} : vector<3x512xf32> to vector<1x512xf32>
    %39 = vector.broadcast %37 : vector<32x1xf32> to vector<32x512xf32>
    %40 = vector.broadcast %38 : vector<1x512xf32> to vector<32x512xf32>
    %41 = arith.mulf %39, %40 : vector<32x512xf32>
    %42 = arith.addf %36, %41 : vector<32x512xf32>
    %43 = vector.extract_strided_slice %3 {offsets = [0, 2], sizes = [32, 1], strides = [1, 1]} : vector<32x4xf32> to vector<32x1xf32>
    %44 = vector.extract_strided_slice %20 {offsets = [2, 0], sizes = [1, 512], strides = [1, 1]} : vector<3x512xf32> to vector<1x512xf32>
    %45 = vector.broadcast %43 : vector<32x1xf32> to vector<32x512xf32>
    %46 = vector.broadcast %44 : vector<1x512xf32> to vector<32x512xf32>
    %47 = arith.mulf %45, %46 : vector<32x512xf32>
    %48 = arith.addf %42, %47 : vector<32x512xf32>
    %49 = vector.broadcast %31 : vector<1x1xf32> to vector<32x512xf32>
    %50 = arith.mulf %49, %48 : vector<32x512xf32>
    %51 = vector.extract_strided_slice %3 {offsets = [0, 3], sizes = [32, 1], strides = [1, 1]} : vector<32x4xf32> to vector<32x1xf32>
    %52 = vector.broadcast %51 : vector<32x1xf32> to vector<32x512xf32>
    %53 = arith.addf %50, %52 : vector<32x512xf32>
    %54 = vector.shape_cast %53 : vector<32x512xf32> to vector<1x32x512xf32>
    %cst_11 = arith.constant dense<0.000000e+00> : vector<1xf32>
    %55 = vector.multi_reduction <add>, %54, %cst_11 [1, 2] : vector<1x32x512xf32> to vector<1xf32>
    %56 = vector.shape_cast %55 : vector<1xf32> to vector<1x1x1xf32>
    %57 = vector.extract %56[0, 0, 0] : f32 from vector<1x1x1xf32>
    %58 = vector.broadcast %57 : f32 to vector<1x1xf32>
    %cst_12 = arith.constant 1.638400e+04 : f32
    %59 = vector.broadcast %cst_12 : f32 to vector<1x1xf32>
    %60 = arith.divf %58, %59 : vector<1x1xf32>
    %61 = vector.broadcast %60 : vector<1x1xf32> to vector<32x512xf32>
    %62 = arith.subf %53, %61 : vector<32x512xf32>
    %63 = arith.mulf %62, %62 : vector<32x512xf32>
    %64 = vector.shape_cast %63 : vector<32x512xf32> to vector<1x32x512xf32>
    %cst_13 = arith.constant dense<0.000000e+00> : vector<1xf32>
    %65 = vector.multi_reduction <add>, %64, %cst_13 [1, 2] : vector<1x32x512xf32> to vector<1xf32>
    %66 = vector.shape_cast %65 : vector<1xf32> to vector<1x1x1xf32>
    %67 = vector.extract %66[0, 0, 0] : f32 from vector<1x1x1xf32>
    %68 = vector.broadcast %67 : f32 to vector<1x1xf32>
    %cst_14 = arith.constant 1.638400e+04 : f32
    %69 = vector.broadcast %cst_14 : f32 to vector<1x1xf32>
    %70 = arith.divf %68, %69 : vector<1x1xf32>
    %cst_15 = arith.constant 9.99999974E-6 : f32
    %71 = vector.broadcast %cst_15 : f32 to vector<1x1xf32>
    %72 = arith.addf %70, %71 : vector<1x1xf32>
    %73 = math.rsqrt %72 : vector<1x1xf32>
    %cst_16 = arith.constant 0.000000e+00 : f32
    %74 = vector.broadcast %cst_16 : f32 to vector<32x512xf32>
    %75 = arith.maximumf %62, %74 : vector<32x512xf32>
    %cst_17 = arith.constant dense<0.000000e+00> : vector<32x512xf32>
    %76 = tpu.matmul %4, %75, %cst_17 {dimension_numbers = #tpu.dot_dimension_numbers<[1], [0], [0], [1], [0, 0, 1, 1], [], []>} : vector<32x32xf32>, vector<32x512xf32>, vector<32x512xf32> -> vector<32x512xf32>
    %77 = vector.broadcast %73 : vector<1x1xf32> to vector<32x512xf32>
    %78 = arith.mulf %76, %77 : vector<32x512xf32>
    %c0_18 = arith.constant 0 : index
    %c0_19 = arith.constant 0 : index
    %79 = vector.load %arg5[%c0_18, %c0_19] : memref<32x512xf32, #tpu.memory_space<vmem>>, vector<32x512xf32>
    %80 = arith.addf %78, %79 : vector<32x512xf32>
    %81 = vector.shape_cast %80 : vector<32x512xf32> to vector<1x32x512xf32>
    %cst_20 = arith.constant dense<0.000000e+00> : vector<1xf32>
    %82 = vector.multi_reduction <add>, %81, %cst_20 [1, 2] : vector<1x32x512xf32> to vector<1xf32>
    %83 = vector.shape_cast %82 : vector<1xf32> to vector<1x1x1xf32>
    %84 = vector.extract %83[0, 0, 0] : f32 from vector<1x1x1xf32>
    %85 = vector.broadcast %84 : f32 to vector<1x1xf32>
    %cst_21 = arith.constant 1.638400e+04 : f32
    %86 = vector.broadcast %cst_21 : f32 to vector<1x1xf32>
    %87 = arith.divf %85, %86 : vector<1x1xf32>
    %88 = vector.broadcast %87 : vector<1x1xf32> to vector<32x512xf32>
    %89 = arith.subf %80, %88 : vector<32x512xf32>
    %90 = arith.mulf %89, %89 : vector<32x512xf32>
    %91 = vector.shape_cast %90 : vector<32x512xf32> to vector<1x32x512xf32>
    %cst_22 = arith.constant dense<0.000000e+00> : vector<1xf32>
    %92 = vector.multi_reduction <add>, %91, %cst_22 [1, 2] : vector<1x32x512xf32> to vector<1xf32>
    %93 = vector.shape_cast %92 : vector<1xf32> to vector<1x1x1xf32>
    %94 = vector.extract %93[0, 0, 0] : f32 from vector<1x1x1xf32>
    %95 = vector.broadcast %94 : f32 to vector<1x1xf32>
    %cst_23 = arith.constant 1.638400e+04 : f32
    %96 = vector.broadcast %cst_23 : f32 to vector<1x1xf32>
    %97 = arith.divf %95, %96 : vector<1x1xf32>
    %cst_24 = arith.constant 9.99999974E-6 : f32
    %98 = vector.broadcast %cst_24 : f32 to vector<1x1xf32>
    %99 = arith.addf %97, %98 : vector<1x1xf32>
    %100 = math.rsqrt %99 : vector<1x1xf32>
    %101 = vector.broadcast %100 : vector<1x1xf32> to vector<32x512xf32>
    %102 = arith.mulf %89, %101 : vector<32x512xf32>
    %103 = arith.index_cast %c0_i32 : i32 to index
    %c0_25 = arith.constant 0 : index
    %c0_26 = arith.constant 0 : index
    %104 = vector.load %arg6[%103, %c0_25, %c0_26] : memref<1x32x512xf32, #tpu.memory_space<vmem>>, vector<1x32x512xf32>
    %105 = vector.shape_cast %104 : vector<1x32x512xf32> to vector<32x512xf32>
    %106 = vector.shape_cast %102 : vector<32x512xf32> to vector<1x32x512xf32>
    tpu.vector_store %arg6[%103, %c0_25, %c0_26], %106 {strides = array<i32>} : memref<1x32x512xf32, #tpu.memory_space<vmem>>, vector<1x32x512xf32>,
    %c1_i32 = arith.constant 1 : i32
    return
  }
  func.func @transform_0(%arg0: i32) -> (i32, i32) {
    %c0_i32 = arith.constant 0 : i32
    %c0_i32_0 = arith.constant 0 : i32
    %c0_i32_1 = arith.constant 0 : i32
    return %c0_i32, %c0_i32_0 : i32, i32
  }
  func.func @transform_1(%arg0: i32) -> (i32, i32, i32) {
    %c0_i32 = arith.constant 0 : i32
    %c0_i32_0 = arith.constant 0 : i32
    %c0_i32_1 = arith.constant 0 : i32
    return %arg0, %c0_i32, %c0_i32_0 : i32, i32, i32
  }
  func.func @transform_2(%arg0: i32) -> (i32, i32) {
    %c0_i32 = arith.constant 0 : i32
    %c0_i32_0 = arith.constant 0 : i32
    %c0_i32_1 = arith.constant 0 : i32
    return %c0_i32, %c0_i32_0 : i32, i32
  }
  func.func @transform_3(%arg0: i32) -> (i32, i32) {
    %c0_i32 = arith.constant 0 : i32
    %c0_i32_0 = arith.constant 0 : i32
    %c0_i32_1 = arith.constant 0 : i32
    return %c0_i32, %c0_i32_0 : i32, i32
  }
  func.func @transform_4(%arg0: i32) -> (i32, i32) {
    %c0_i32 = arith.constant 0 : i32
    %c0_i32_0 = arith.constant 0 : i32
    %c0_i32_1 = arith.constant 0 : i32
    return %c0_i32, %c0_i32_0 : i32, i32
  }
  func.func @transform_5(%arg0: i32) -> (i32, i32, i32) {
    %c0_i32 = arith.constant 0 : i32
    %c0_i32_0 = arith.constant 0 : i32
    %c0_i32_1 = arith.constant 0 : i32
    return %arg0, %c0_i32, %c0_i32_0 : i32, i32, i32
  }
}

</mosaic_0001>

<llo_original>
// kernel: positional_encoding_3d.1
$region0: #{positional_encoding_3d.1}
  #allocation0 [shape = 'u32[]', space=smem, size = 0x4, offset = 0x4, fixed_abs, tag = 'smem constant byte address 0x4 - core index']
  #allocation1 [shape = 'u32[144,128]{1,0:T(1,128)}', space=vmem, size = 0x12000, scoped, tag = 'internal scratch']
  %s0 = inlined_call_operand.vmem [shape: f32[3,2], index: 0, kind: input, shape index: {}]
  %s1 = inlined_call_operand.vmem [shape: f32[2,3,512], index: 1, kind: input, shape index: {}]
  %s2 = inlined_call_operand.vmem [shape: f32[32,4], index: 2, kind: input, shape index: {}]
  %s3 = inlined_call_operand.vmem [shape: f32[32,32], index: 3, kind: input, shape index: {}]
  %s4 = inlined_call_operand.vmem [shape: f32[32,512], index: 4, kind: input, shape index: {}]
  %s5 = inlined_call_operand.vmem [shape: f32[2,32,512], index: 5, kind: output, shape index: {}]
  %s6 = sld [smem:[#allocation0]]
  $region53: #{positional_encoding_3d.1} parent=0
    _
  %s8 = ssub.s32 1, %s6
  %s9 = scalar_select 0, %s8, %s6
  loop: start=0, step=1, limit=4
  $region2: #{positional_encoding_3d.1} parent=0 // loop_pre_header
    _
  $region3: #{positional_encoding_3d.1} parent=0 // loop_header
    %s11 = sphi 0, %s15
    %p12 = scmp.ge.s32.totalorder %s11, 4
    %s19 = sphi 0, %s19
    %s21 = sphi 0, %s19
    %s22 = sphi 0, %s21
    %s36 = sphi 0, %s22
    %s42 = sphi 0, %s44
    %s45 = sphi 0, %s42
    %s46 = sphi 0, %s45
    %s62 = sphi 0, %s46
    %s66 = sphi 0, %s66
    %s68 = sphi 0, %s66
    %s69 = sphi 0, %s68
    %s83 = sphi 0, %s69
    %s87 = sphi 0, %s87
    %s89 = sphi 0, %s87
    %s90 = sphi 0, %s89
    %s104 = sphi 0, %s90
    %s108 = sphi 0, %s108
    %s110 = sphi 0, %s108
    %s111 = sphi 0, %s110
    %s125 = sphi 0, %s111
    %s131 = sphi 0, %s133
    %s134 = sphi 0, %s131
    %s135 = sphi 0, %s134
    %s151 = sphi 0, %s135
  $region4: #{positional_encoding_3d.1} parent=0 // loop_header_branch
    %14 = sbr.rel (%p12) target = $region8
  $region5: #{positional_encoding_3d.1} parent=0 // loop_body
    %s16 = ssub.s32 %s11, 1
    %s17 = ssub.s32 %s11, 2
    %s18 = sadd.s32 %s11, 1
    %s20 = sadd.s32 %s19, 1
    %p23 = scmp.eq.s32.totalorder %s11, 1
    %p24 = scmp.ne.s32.totalorder %s19, %s21
    %p25 = scmp.eq.s32.totalorder %s11, 0
    %p26 = por %p24, %p25
    %p27 = scmp.ne.s32.totalorder %s19, %s21
    %p28 = scmp.eq.s32.totalorder %s16, 1
    %p29 = por %p27, %p28
    %p30 = scmp.ne.s32.totalorder %s21, %s22
    %p31 = scmp.eq.s32.totalorder %s16, 0
    %p32 = por %p30, %p31
    %p33 = scmp.ne.s32.totalorder %s21, %s22
    %p34 = scmp.eq.s32.totalorder %s17, 1
    %p35 = por %p33, %p34
    %p37 = scmp.ne.s32.totalorder %s22, %s36
    %p38 = scmp.eq.s32.totalorder %s17, 0
    %p39 = por %p37, %p38
    %s40 = ssub.s32 %s11, %s18
    %p41 = scmp.eq.s32.totalorder %s40, 0
    %s43 = sadd.s32 %s42, 1
    %s44 = scalar_select %p41, %s42, %s43
    %p47 = pneg %p41
    %p48 = scmp.eq.s32.totalorder %s11, 1
    %p49 = por %p47, %p48
    %p50 = scmp.ne.s32.totalorder %s42, %s45
    %p51 = scmp.eq.s32.totalorder %s11, 0
    %p52 = por %p50, %p51
    %p53 = scmp.ne.s32.totalorder %s42, %s45
    %p54 = scmp.eq.s32.totalorder %s16, 1
    %p55 = por %p53, %p54
    %p56 = scmp.ne.s32.totalorder %s45, %s46
    %p57 = scmp.eq.s32.totalorder %s16, 0
    %p58 = por %p56, %p57
    %p59 = scmp.ne.s32.totalorder %s45, %s46
    %p60 = scmp.eq.s32.totalorder %s17, 1
    %p61 = por %p59, %p60
    %p63 = scmp.ne.s32.totalorder %s46, %s62
    %p64 = scmp.eq.s32.totalorder %s17, 0
    %p65 = por %p63, %p64
    %s67 = sadd.s32 %s66, 1
    %p70 = scmp.eq.s32.totalorder %s11, 1
    %p71 = scmp.ne.s32.totalorder %s66, %s68
    %p72 = scmp.eq.s32.totalorder %s11, 0
    %p73 = por %p71, %p72
    %p74 = scmp.ne.s32.totalorder %s66, %s68
    %p75 = scmp.eq.s32.totalorder %s16, 1
    %p76 = por %p74, %p75
    %p77 = scmp.ne.s32.totalorder %s68, %s69
    %p78 = scmp.eq.s32.totalorder %s16, 0
    %p79 = por %p77, %p78
    %p80 = scmp.ne.s32.totalorder %s68, %s69
    %p81 = scmp.eq.s32.totalorder %s17, 1
    %p82 = por %p80, %p81
    %p84 = scmp.ne.s32.totalorder %s69, %s83
    %p85 = scmp.eq.s32.totalorder %s17, 0
    %p86 = por %p84, %p85
    %s88 = sadd.s32 %s87, 1
    %p91 = scmp.eq.s32.totalorder %s11, 1
    %p92 = scmp.ne.s32.totalorder %s87, %s89
    %p93 = scmp.eq.s32.totalorder %s11, 0
    %p94 = por %p92, %p93
    %p95 = scmp.ne.s32.totalorder %s87, %s89
    %p96 = scmp.eq.s32.totalorder %s16, 1
    %p97 = por %p95, %p96
    %p98 = scmp.ne.s32.totalorder %s89, %s90
    %p99 = scmp.eq.s32.totalorder %s16, 0
    %p100 = por %p98, %p99
    %p101 = scmp.ne.s32.totalorder %s89, %s90
    %p102 = scmp.eq.s32.totalorder %s17, 1
    %p103 = por %p101, %p102
    %p105 = scmp.ne.s32.totalorder %s90, %s104
    %p106 = scmp.eq.s32.totalorder %s17, 0
    %p107 = por %p105, %p106
    %s109 = sadd.s32 %s108, 1
    %p112 = scmp.eq.s32.totalorder %s11, 1
    %p113 = scmp.ne.s32.totalorder %s108, %s110
    %p114 = scmp.eq.s32.totalorder %s11, 0
    %p115 = por %p113, %p114
    %p116 = scmp.ne.s32.totalorder %s108, %s110
    %p117 = scmp.eq.s32.totalorder %s16, 1
    %p118 = por %p116, %p117
    %p119 = scmp.ne.s32.totalorder %s110, %s111
    %p120 = scmp.eq.s32.totalorder %s16, 0
    %p121 = por %p119, %p120
    %p122 = scmp.ne.s32.totalorder %s110, %s111
    %p123 = scmp.eq.s32.totalorder %s17, 1
    %p124 = por %p122, %p123
    %p126 = scmp.ne.s32.totalorder %s111, %s125
    %p127 = scmp.eq.s32.totalorder %s17, 0
    %p128 = por %p126, %p127
    %s129 = ssub.s32 %s11, %s18
    %p130 = scmp.eq.s32.totalorder %s129, 0
    %s132 = sadd.s32 %s131, 1
    %s133 = scalar_select %p130, %s131, %s132
    %p136 = pneg %p130
    %p137 = scmp.eq.s32.totalorder %s11, 1
    %p138 = por %p136, %p137
    %p139 = scmp.ne.s32.totalorder %s131, %s134
    %p140 = scmp.eq.s32.totalorder %s11, 0
    %p141 = por %p139, %p140
    %p142 = scmp.ne.s32.totalorder %s131, %s134
    %p143 = scmp.eq.s32.totalorder %s16, 1
    %p144 = por %p142, %p143
    %p145 = scmp.ne.s32.totalorder %s134, %s135
    %p146 = scmp.eq.s32.totalorder %s16, 0
    %p147 = por %p145, %p146
    %p148 = scmp.ne.s32.totalorder %s134, %s135
    %p149 = scmp.eq.s32.totalorder %s17, 1
    %p150 = por %p148, %p149
    %p152 = scmp.ne.s32.totalorder %s135, %s151
    %p153 = scmp.eq.s32.totalorder %s17, 0
    %p154 = por %p152, %p153
    %p155 = scmp.le.s32.totalorder 1, %s11
    %p156 = scmp.lt.s32.totalorder %s11, 3
    %p157 = pnand %p155, %p156
    %p158 = pneg %p157
    // Predicated region
    $region9: #{positional_encoding_3d.1} parent=5 // pred_check
      _
    $region10: #{positional_encoding_3d.1} parent=5 // pred_check_branch
      %160 = sbr.rel (%p157) target = $region12
    $region11: #{positional_encoding_3d.1} parent=5 // pred_region
      %s161 = ssub.s32 %s11, 1
      // Predicated region
      $region13: #{positional_encoding_3d.1} parent=11 // pred_check
        %p162 = pneg %p32
      $region14: #{positional_encoding_3d.1} parent=11 // pred_check_branch
        %164 = sbr.rel (%p162) target = $region16
      $region15: #{positional_encoding_3d.1} parent=11 // pred_region
        _
      $region16: #{positional_encoding_3d.1} parent=11 // pred_fallthru
        _
      // Predicated region
      $region17: #{positional_encoding_3d.1} parent=11 // pred_check
        %p165 = pneg %p79
      $region18: #{positional_encoding_3d.1} parent=11 // pred_check_branch
        %167 = sbr.rel (%p165) target = $region20
      $region19: #{positional_encoding_3d.1} parent=11 // pred_region
        _
      $region20: #{positional_encoding_3d.1} parent=11 // pred_fallthru
        _
      // Predicated region
      $region21: #{positional_encoding_3d.1} parent=11 // pred_check
        %p168 = pneg %p100
      $region22: #{positional_encoding_3d.1} parent=11 // pred_check_branch
        %170 = sbr.rel (%p168) target = $region24
      $region23: #{positional_encoding_3d.1} parent=11 // pred_region
        _
      $region24: #{positional_encoding_3d.1} parent=11 // pred_fallthru
        _
      // Predicated region
      $region25: #{positional_encoding_3d.1} parent=11 // pred_check
        %p171 = pneg %p121
      $region26: #{positional_encoding_3d.1} parent=11 // pred_check_branch
        %173 = sbr.rel (%p171) target = $region28
      $region27: #{positional_encoding_3d.1} parent=11 // pred_region
        _
      $region28: #{positional_encoding_3d.1} parent=11 // pred_fallthru
        _
    $region12: #{positional_encoding_3d.1} parent=5 // pred_fallthru
      _
    %p174 = scmp.lt.s32.totalorder %s11, 2
    // Predicated region
    $region29: #{positional_encoding_3d.1} parent=5 // pred_check
      %p175 = pneg %p174
    $region30: #{positional_encoding_3d.1} parent=5 // pred_check_branch
      %177 = sbr.rel (%p175) target = $region32
    $region31: #{positional_encoding_3d.1} parent=5 // pred_region
      // Predicated region
      $region33: #{positional_encoding_3d.1} parent=31 // pred_check
        %p178 = pneg %p52
      $region34: #{positional_encoding_3d.1} parent=31 // pred_check_branch
        %180 = sbr.rel (%p178) target = $region36
      $region35: #{positional_encoding_3d.1} parent=31 // pred_region
        %p181 = scmp.lt.s32.totalorder %s11, 1
        %s182 = scalar_select %p181, %s11, 1
        %s183 = smul.addr %s182, 4
        %s184 = smul.addr %s183, 4
        %s185 = scalar_lea.vmem %s1, %s184
      $region36: #{positional_encoding_3d.1} parent=31 // pred_fallthru
        _
    $region32: #{positional_encoding_3d.1} parent=5 // pred_fallthru
      _
    %p186 = scmp.le.s32.totalorder 1, %s11
    %p187 = scmp.lt.s32.totalorder %s11, 3
    %p188 = pnand %p186, %p187
    %p189 = pneg %p188
    // Predicated region
    $region37: #{positional_encoding_3d.1} parent=5 // pred_check
      _
    $region38: #{positional_encoding_3d.1} parent=5 // pred_check_branch
      %191 = sbr.rel (%p188) target = $region40
    $region39: #{positional_encoding_3d.1} parent=5 // pred_region
      %s192 = ssub.s32 %s11, 1
      %p193 = pneg %p32
      %p194 = pneg %p29
      %p195 = scmp.lt.s32.totalorder %s16, 1
      %s196 = scalar_select %p195, %s16, 1
      %s197 = smul.addr %s196, 4
      %s198 = smul.addr %s197, 4
      %s199 = scalar_lea.vmem %s1, %s198
      %p200 = pneg %p58
      %p201 = pneg %p55
      %p202 = pneg %p79
      %p203 = pneg %p76
      %p204 = pneg %p100
      %p205 = pneg %p97
      %p206 = pneg %p121
      %p207 = pneg %p118
      %p208 = pneg %p147
      %p209 = pneg %p144
      %p210 = scmp.lt.s32.totalorder %s16, 1
      %s211 = scalar_select %p210, %s16, 1
      %s212 = smul.addr %s211, 16
      %s213 = smul.addr %s212, 8
      %s214 = scalar_lea.vmem %s5, %s213
      %p215 = scmp.lt.s32.totalorder %s16, 1
      %s216 = scalar_select %p215, %s16, 1
      %s217 = smul.addr %s216, 4
      %s218 = smul.addr %s217, 4
      %s219 = scalar_lea.vmem %s1, %s218
      %p220 = scmp.lt.s32.totalorder %s16, 1
      %s221 = scalar_select %p220, %s16, 1
      %s222 = smul.addr %s221, 16
      %s223 = smul.addr %s222, 8
      %s224 = scalar_lea.vmem %s5, %s223
      %v225 = vld [vmem:[%s0] sm:$0x7]
      %v226 = vld [vmem:[%s2] sm:$0xff]
      %v227 = vld [vmem:[%s2 + $0x8] sm:$0xff]
      %v228 = vld [vmem:[%s2 + $0x10] sm:$0xff]
      %v229 = vld [vmem:[%s2 + $0x18] sm:$0xff]
      %v230 = vld [vmem:[%s3] sm:$0xff]
      %v231 = vld [vmem:[%s3 + $0x8] sm:$0xff]
      %v232 = vld [vmem:[%s3 + $0x10] sm:$0xff]
      %v233 = vld [vmem:[%s3 + $0x18] sm:$0xff]
      %v234 = vld [vmem:[%s219] sm:$0x77]
      %v235 = vld [vmem:[%s219 + $0x8] sm:$0x77]
      %237 = vset.pattern.permute.xlu0 0
      %238 = vperm.xlu0 %237, %v225
      %v239 = vpop.permute.xlu0 %238
      %v241 = vunpack.c.l.s4 839922192
      %v242 = vunpack.c.0.s8 %v241
      %v243 = vlaneseq
      %v244 = vshrl.u32 %v243, 7
      %v245 = vsub.s32 %v242, %v244
      %v246 = vrot.slane %v239, %v245
      %v248 = vmul.f32 %v234, %v246
      %v249 = vmul.f32 %v235, %v246
      %250 = vset.pattern.permute.xlu0 1
      %251 = vperm.xlu0 %250, %v225
      %v252 = vpop.permute.xlu0 %251
      %v254 = vunpack.c.l.s4 839922192
      %v255 = vunpack.c.0.s8 %v254
      %v256 = vlaneseq
      %v257 = vshrl.u32 %v256, 7
      %v258 = vsub.s32 %v255, %v257
      %v259 = vrot.slane %v252, %v258
      %v261 = vadd.f32 %v248, %v259
      %v262 = vadd.f32 %v249, %v259
      %v265 = vcombine.high %v261, %v261
      %v266 = vcombine.high %v262, %v262
      %vm269 = vcmask 1042432
      %v270 = vsel %vm269, %v261, 0.0
      %v271 = vsel %vm269, %v265, 0.0
      %v272 = vadd.f32 %v270, %v271
      %v273 = vsel %vm269, %v262, 0.0
      %v274 = vadd.f32 %v272, %v273
      %v275 = vsel %vm269, %v266, 0.0
      %v276 = vadd.f32 %v274, %v275
      %277 = vadd.xlane.f32.xlu0 %v276
      %v278 = vpop.xlane.xlu0 %277
      %v279 = vrot.slane %v278, 4
      %v280 = vadd.f32 %v278, %v279
      %v281 = vrot.slane %v280, 2
      %v282 = vadd.f32 %v280, %v281
      %v283 = vrot.slane %v282, 1
      %v284 = vadd.f32 %v282, %v283
      %s285 = vtos %v284
      %v286 = vstv %s285
      %v287 = vrcp.pop 1536.0
      %v288 = vmul.f32 %v286, %v287
      %v289 = vsub.f32 %v261, %v288
      %v290 = vsub.f32 %v262, %v288
      %v291 = vmul.f32 %v289, %v289
      %v292 = vmul.f32 %v290, %v290
      %v295 = vcombine.high %v291, %v291
      %v296 = vcombine.high %v292, %v292
      %v299 = vsel %vm269, %v291, 0.0
      %v300 = vsel %vm269, %v295, 0.0
      %v301 = vadd.f32 %v299, %v300
      %v302 = vsel %vm269, %v292, 0.0
      %v303 = vadd.f32 %v301, %v302
      %v304 = vsel %vm269, %v296, 0.0
      %v305 = vadd.f32 %v303, %v304
      %306 = vadd.xlane.f32.xlu0 %v305
      %v307 = vpop.xlane.xlu0 %306
      %v308 = vrot.slane %v307, 4
      %v309 = vadd.f32 %v307, %v308
      %v310 = vrot.slane %v309, 2
      %v311 = vadd.f32 %v309, %v310
      %v312 = vrot.slane %v311, 1
      %v313 = vadd.f32 %v311, %v312
      %s314 = vtos %v313
      %v315 = vstv %s314
      %v316 = vmul.f32 %v315, %v287
      %v317 = vadd.f32 %v316, 1e-05
      %v318 = vrsqrt.pop %v317
      %320 = vset.pattern.permute.xlu0 0
      %321 = vperm.xlu0 %320, %v226
      %v322 = vpop.permute.xlu0 %321
      %325 = vset.pattern.permute.xlu0 0
      %326 = vperm.xlu0 %325, %v227
      %v327 = vpop.permute.xlu0 %326
      %330 = vset.pattern.permute.xlu0 0
      %331 = vperm.xlu0 %330, %v228
      %v332 = vpop.permute.xlu0 %331
      %335 = vset.pattern.permute.xlu0 0
      %336 = vperm.xlu0 %335, %v229
      %v337 = vpop.permute.xlu0 %336
      %v341 = vlaneseq
      %v342 = vshrl.u32 %v341, 7
      %v343 = vsub.s32 0, %v342
      %v344 = vrot.slane %v289, %v343
      %v345 = vlaneseq
      %v346 = vshrl.u32 %v345, 7
      %v347 = vsub.s32 4, %v346
      %v348 = vrot.slane %v289, %v347
      %v349 = vlaneseq
      %v350 = vshrl.u32 %v349, 7
      %v351 = vsub.s32 0, %v350
      %v352 = vrot.slane %v290, %v351
      %v353 = vlaneseq
      %v354 = vshrl.u32 %v353, 7
      %v355 = vsub.s32 4, %v354
      %v356 = vrot.slane %v290, %v355
      %v361 = vlaneseq
      %v362 = vshrl.u32 %v361, 7
      %v363 = vsub.s32 0, %v362
      %v364 = vrot.slane %v344, %v363
      %v365 = vlaneseq
      %v366 = vshrl.u32 %v365, 7
      %v367 = vsub.s32 0, %v366
      %v368 = vrot.slane %v348, %v367
      %v369 = vlaneseq
      %v370 = vshrl.u32 %v369, 7
      %v371 = vsub.s32 0, %v370
      %v372 = vrot.slane %v352, %v371
      %v373 = vlaneseq
      %v374 = vshrl.u32 %v373, 7
      %v375 = vsub.s32 0, %v374
      %v376 = vrot.slane %v356, %v375
      %v377 = vmul.f32 %v322, %v364
      %v378 = vmul.f32 %v322, %v368
      %v379 = vmul.f32 %v322, %v372
      %v380 = vmul.f32 %v322, %v376
      %v381 = vmul.f32 %v327, %v364
      %v382 = vmul.f32 %v327, %v368
      %v383 = vmul.f32 %v327, %v372
      %v384 = vmul.f32 %v327, %v376
      %v385 = vmul.f32 %v332, %v364
      %v386 = vmul.f32 %v332, %v368
      %v387 = vmul.f32 %v332, %v372
      %v388 = vmul.f32 %v332, %v376
      %v389 = vmul.f32 %v337, %v364
      %v390 = vmul.f32 %v337, %v368
      %v391 = vmul.f32 %v337, %v372
      %v392 = vmul.f32 %v337, %v376
      %393 = vset.pattern.permute.xlu0 1
      %394 = vperm.xlu0 %393, %v226
      %v395 = vpop.permute.xlu0 %394
      %397 = vset.pattern.permute.xlu0 1
      %398 = vperm.xlu0 %397, %v227
      %v399 = vpop.permute.xlu0 %398
      %401 = vset.pattern.permute.xlu0 1
      %402 = vperm.xlu0 %401, %v228
      %v403 = vpop.permute.xlu0 %402
      %405 = vset.pattern.permute.xlu0 1
      %406 = vperm.xlu0 %405, %v229
      %v407 = vpop.permute.xlu0 %406
      %v409 = vlaneseq
      %v410 = vshrl.u32 %v409, 7
      %v411 = vsub.s32 1, %v410
      %v412 = vrot.slane %v289, %v411
      %v413 = vlaneseq
      %v414 = vshrl.u32 %v413, 7
      %v415 = vsub.s32 5, %v414
      %v416 = vrot.slane %v289, %v415
      %v417 = vlaneseq
      %v418 = vshrl.u32 %v417, 7
      %v419 = vsub.s32 1, %v418
      %v420 = vrot.slane %v290, %v419
      %v421 = vlaneseq
      %v422 = vshrl.u32 %v421, 7
      %v423 = vsub.s32 5, %v422
      %v424 = vrot.slane %v290, %v423
      %v429 = vlaneseq
      %v430 = vshrl.u32 %v429, 7
      %v431 = vsub.s32 1, %v430
      %v432 = vrot.slane %v412, %v431
      %v433 = vlaneseq
      %v434 = vshrl.u32 %v433, 7
      %v435 = vsub.s32 1, %v434
      %v436 = vrot.slane %v416, %v435
      %v437 = vlaneseq
      %v438 = vshrl.u32 %v437, 7
      %v439 = vsub.s32 1, %v438
      %v440 = vrot.slane %v420, %v439
      %v441 = vlaneseq
      %v442 = vshrl.u32 %v441, 7
      %v443 = vsub.s32 1, %v442
      %v444 = vrot.slane %v424, %v443
      %v445 = vmul.f32 %v395, %v432
      %v446 = vmul.f32 %v395, %v436
      %v447 = vmul.f32 %v395, %v440
      %v448 = vmul.f32 %v395, %v444
      %v449 = vmul.f32 %v399, %v432
      %v450 = vmul.f32 %v399, %v436
      %v451 = vmul.f32 %v399, %v440
      %v452 = vmul.f32 %v399, %v444
      %v453 = vmul.f32 %v403, %v432
      %v454 = vmul.f32 %v403, %v436
      %v455 = vmul.f32 %v403, %v440
      %v456 = vmul.f32 %v403, %v444
      %v457 = vmul.f32 %v407, %v432
      %v458 = vmul.f32 %v407, %v436
      %v459 = vmul.f32 %v407, %v440
      %v460 = vmul.f32 %v407, %v444
      %v461 = vadd.f32 %v377, %v445
      %v462 = vadd.f32 %v378, %v446
      %v463 = vadd.f32 %v379, %v447
      %v464 = vadd.f32 %v380, %v448
      %v465 = vadd.f32 %v381, %v449
      %v466 = vadd.f32 %v382, %v450
      %v467 = vadd.f32 %v383, %v451
      %v468 = vadd.f32 %v384, %v452
      %v469 = vadd.f32 %v385, %v453
      %v470 = vadd.f32 %v386, %v454
      %v471 = vadd.f32 %v387, %v455
      %v472 = vadd.f32 %v388, %v456
      %v473 = vadd.f32 %v389, %v457
      %v474 = vadd.f32 %v390, %v458
      %v475 = vadd.f32 %v391, %v459
      %v476 = vadd.f32 %v392, %v460
      %477 = vset.pattern.permute.xlu0 2
      %478 = vperm.xlu0 %477, %v226
      %v479 = vpop.permute.xlu0 %478
      %481 = vset.pattern.permute.xlu0 2
      %482 = vperm.xlu0 %481, %v227
      %v483 = vpop.permute.xlu0 %482
      %485 = vset.pattern.permute.xlu0 2
      %486 = vperm.xlu0 %485, %v228
      %v487 = vpop.permute.xlu0 %486
      %489 = vset.pattern.permute.xlu0 2
      %490 = vperm.xlu0 %489, %v229
      %v491 = vpop.permute.xlu0 %490
      %v493 = vlaneseq
      %v494 = vshrl.u32 %v493, 7
      %v495 = vsub.s32 2, %v494
      %v496 = vrot.slane %v289, %v495
      %v497 = vlaneseq
      %v498 = vshrl.u32 %v497, 7
      %v499 = vsub.s32 6, %v498
      %v500 = vrot.slane %v289, %v499
      %v501 = vlaneseq
      %v502 = vshrl.u32 %v501, 7
      %v503 = vsub.s32 2, %v502
      %v504 = vrot.slane %v290, %v503
      %v505 = vlaneseq
      %v506 = vshrl.u32 %v505, 7
      %v507 = vsub.s32 6, %v506
      %v508 = vrot.slane %v290, %v507
      %v513 = vlaneseq
      %v514 = vshrl.u32 %v513, 7
      %v515 = vsub.s32 2, %v514
      %v516 = vrot.slane %v496, %v515
      %v517 = vlaneseq
      %v518 = vshrl.u32 %v517, 7
      %v519 = vsub.s32 2, %v518
      %v520 = vrot.slane %v500, %v519
      %v521 = vlaneseq
      %v522 = vshrl.u32 %v521, 7
      %v523 = vsub.s32 2, %v522
      %v524 = vrot.slane %v504, %v523
      %v525 = vlaneseq
      %v526 = vshrl.u32 %v525, 7
      %v527 = vsub.s32 2, %v526
      %v528 = vrot.slane %v508, %v527
      %v529 = vmul.f32 %v479, %v516
      %v530 = vmul.f32 %v479, %v520
      %v531 = vmul.f32 %v479, %v524
      %v532 = vmul.f32 %v479, %v528
      %v533 = vmul.f32 %v483, %v516
      %v534 = vmul.f32 %v483, %v520
      %v535 = vmul.f32 %v483, %v524
      %v536 = vmul.f32 %v483, %v528
      %v537 = vmul.f32 %v487, %v516
      %v538 = vmul.f32 %v487, %v520
      %v539 = vmul.f32 %v487, %v524
      %v540 = vmul.f32 %v487, %v528
      %v541 = vmul.f32 %v491, %v516
      %v542 = vmul.f32 %v491, %v520
      %v543 = vmul.f32 %v491, %v524
      %v544 = vmul.f32 %v491, %v528
      %v545 = vadd.f32 %v461, %v529
      %v546 = vadd.f32 %v462, %v530
      %v547 = vadd.f32 %v463, %v531
      %v548 = vadd.f32 %v464, %v532
      %v549 = vadd.f32 %v465, %v533
      %v550 = vadd.f32 %v466, %v534
      %v551 = vadd.f32 %v467, %v535
      %v552 = vadd.f32 %v468, %v536
      %v553 = vadd.f32 %v469, %v537
      %v554 = vadd.f32 %v470, %v538
      %v555 = vadd.f32 %v471, %v539
      %v556 = vadd.f32 %v472, %v540
      %v557 = vadd.f32 %v473, %v541
      %v558 = vadd.f32 %v474, %v542
      %v559 = vadd.f32 %v475, %v543
      %v560 = vadd.f32 %v476, %v544
      %v561 = vmul.f32 %v318, %v545
      %v562 = vmul.f32 %v318, %v546
      %v563 = vmul.f32 %v318, %v547
      %v564 = vmul.f32 %v318, %v548
      %v565 = vmul.f32 %v318, %v549
      %v566 = vmul.f32 %v318, %v550
      %v567 = vmul.f32 %v318, %v551
      %v568 = vmul.f32 %v318, %v552
      %v569 = vmul.f32 %v318, %v553
      %v570 = vmul.f32 %v318, %v554
      %v571 = vmul.f32 %v318, %v555
      %v572 = vmul.f32 %v318, %v556
      %v573 = vmul.f32 %v318, %v557
      %v574 = vmul.f32 %v318, %v558
      %v575 = vmul.f32 %v318, %v559
      %v576 = vmul.f32 %v318, %v560
      %577 = vset.pattern.permute.xlu0 3
      %578 = vperm.xlu0 %577, %v226
      %v579 = vpop.permute.xlu0 %578
      %581 = vset.pattern.permute.xlu0 3
      %582 = vperm.xlu0 %581, %v227
      %v583 = vpop.permute.xlu0 %582
      %585 = vset.pattern.permute.xlu0 3
      %586 = vperm.xlu0 %585, %v228
      %v587 = vpop.permute.xlu0 %586
      %589 = vset.pattern.permute.xlu0 3
      %590 = vperm.xlu0 %589, %v229
      %v591 = vpop.permute.xlu0 %590
      %v593 = vadd.f32 %v561, %v579
      %v594 = vadd.f32 %v562, %v579
      %v595 = vadd.f32 %v563, %v579
      %v596 = vadd.f32 %v564, %v579
      %v597 = vadd.f32 %v565, %v583
      %v598 = vadd.f32 %v566, %v583
      %v599 = vadd.f32 %v567, %v583
      %v600 = vadd.f32 %v568, %v583
      %v601 = vadd.f32 %v569, %v587
      %v602 = vadd.f32 %v570, %v587
      %v603 = vadd.f32 %v571, %v587
      %v604 = vadd.f32 %v572, %v587
      %v605 = vadd.f32 %v573, %v591
      %v606 = vadd.f32 %v574, %v591
      %v607 = vadd.f32 %v575, %v591
      %v608 = vadd.f32 %v576, %v591
      %v609 = vadd.f32 %v593, %v594
      %v610 = vadd.f32 %v609, %v595
      %v611 = vadd.f32 %v610, %v596
      %v612 = vadd.f32 %v611, %v597
      %v613 = vadd.f32 %v612, %v598
      %v614 = vadd.f32 %v613, %v599
      %v615 = vadd.f32 %v614, %v600
      %v616 = vadd.f32 %v615, %v601
      %v617 = vadd.f32 %v616, %v602
      %v618 = vadd.f32 %v617, %v603
      %v619 = vadd.f32 %v618, %v604
      %v620 = vadd.f32 %v619, %v605
      %v621 = vadd.f32 %v620, %v606
      %v622 = vadd.f32 %v621, %v607
      %v623 = vadd.f32 %v622, %v608
      %624 = vadd.xlane.f32.xlu0 %v623
      %v625 = vpop.xlane.xlu0 %624
      %v626 = vrot.slane %v625, 4
      %v627 = vadd.f32 %v625, %v626
      %v628 = vrot.slane %v627, 2
      %v629 = vadd.f32 %v627, %v628
      %v630 = vrot.slane %v629, 1
      %v631 = vadd.f32 %v629, %v630
      %s632 = vtos %v631
      %v633 = vstv %s632
      %v634 = vrcp.pop 16384.0
      %v635 = vmul.f32 %v633, %v634
      %v636 = vsub.f32 %v593, %v635
      %v637 = vsub.f32 %v594, %v635
      %v638 = vsub.f32 %v595, %v635
      %v639 = vsub.f32 %v596, %v635
      %v640 = vsub.f32 %v597, %v635
      %v641 = vsub.f32 %v598, %v635
      %v642 = vsub.f32 %v599, %v635
      %v643 = vsub.f32 %v600, %v635
      %v644 = vsub.f32 %v601, %v635
      %v645 = vsub.f32 %v602, %v635
      %v646 = vsub.f32 %v603, %v635
      %v647 = vsub.f32 %v604, %v635
      %v648 = vsub.f32 %v605, %v635
      %v649 = vsub.f32 %v606, %v635
      %v650 = vsub.f32 %v607, %v635
      %v651 = vsub.f32 %v608, %v635
      %v652 = vmul.f32 %v636, %v636
      %v653 = vmul.f32 %v637, %v637
      %v654 = vmul.f32 %v638, %v638
      %v655 = vmul.f32 %v639, %v639
      %v656 = vmul.f32 %v640, %v640
      %v657 = vmul.f32 %v641, %v641
      %v658 = vmul.f32 %v642, %v642
      %v659 = vmul.f32 %v643, %v643
      %v660 = vmul.f32 %v644, %v644
      %v661 = vmul.f32 %v645, %v645
      %v662 = vmul.f32 %v646, %v646
      %v663 = vmul.f32 %v647, %v647
      %v664 = vmul.f32 %v648, %v648
      %v665 = vmul.f32 %v649, %v649
      %v666 = vmul.f32 %v650, %v650
      %v667 = vmul.f32 %v651, %v651
      %v668 = vadd.f32 %v652, %v653
      %v669 = vadd.f32 %v668, %v654
      %v670 = vadd.f32 %v669, %v655
      %v671 = vadd.f32 %v670, %v656
      %v672 = vadd.f32 %v671, %v657
      %v673 = vadd.f32 %v672, %v658
      %v674 = vadd.f32 %v673, %v659
      %v675 = vadd.f32 %v674, %v660
      %v676 = vadd.f32 %v675, %v661
      %v677 = vadd.f32 %v676, %v662
      %v678 = vadd.f32 %v677, %v663
      %v679 = vadd.f32 %v678, %v664
      %v680 = vadd.f32 %v679, %v665
      %v681 = vadd.f32 %v680, %v666
      %v682 = vadd.f32 %v681, %v667
      %683 = vadd.xlane.f32.xlu0 %v682
      %v684 = vpop.xlane.xlu0 %683
      %v685 = vrot.slane %v684, 4
      %v686 = vadd.f32 %v684, %v685
      %v687 = vrot.slane %v686, 2
      %v688 = vadd.f32 %v686, %v687
      %v689 = vrot.slane %v688, 1
      %v690 = vadd.f32 %v688, %v689
      %s691 = vtos %v690
      %v692 = vstv %s691
      %v693 = vmul.f32 %v692, %v634
      %v694 = vadd.f32 %v693, 1e-05
      %v695 = vrsqrt.pop %v694
      %v696 = vmax.f32 %v636, 0.0
      %v697 = vmax.f32 %v637, 0.0
      %v698 = vmax.f32 %v638, 0.0
      %v699 = vmax.f32 %v639, 0.0
      %v700 = vmax.f32 %v640, 0.0
      %v701 = vmax.f32 %v641, 0.0
      %v702 = vmax.f32 %v642, 0.0
      %v703 = vmax.f32 %v643, 0.0
      %v704 = vmax.f32 %v644, 0.0
      %v705 = vmax.f32 %v645, 0.0
      %v706 = vmax.f32 %v646, 0.0
      %v707 = vmax.f32 %v647, 0.0
      %v708 = vmax.f32 %v648, 0.0
      %v709 = vmax.f32 %v649, 0.0
      %v710 = vmax.f32 %v650, 0.0
      %v711 = vmax.f32 %v651, 0.0
      %vm712 = vcmask 261120
      %v714 = vsel %vm712, %v230, 0
      %v717 = vsel %vm712, %v231, 0
      %v720 = vsel %vm712, %v232, 0
      %v723 = vsel %vm712, %v233, 0
      %725 = vmatprep.subr.mxu0 0.0
      %726 = vmatpush1.msra.mxu0 0.0
      %727 = vmatprep.subr.mxu0 0.0
      %728 = vmatpush1.msra.mxu0 0.0
      %729 = vmatprep.subr.mxu0 0.0
      %730 = vmatpush1.msra.mxu0 0.0
      %731 = vmatprep.subr.mxu0 0.0
      %732 = vmatpush1.msra.mxu0 0.0
      %733 = vmatprep.subr.mxu0 0.0
      %734 = vmatpush1.msra.mxu0 0.0
      %735 = vmatprep.subr.mxu0 0.0
      %736 = vmatpush1.msra.mxu0 0.0
      %737 = vmatprep.subr.mxu0 0.0
      %738 = vmatpush1.msra.mxu0 0.0
      %739 = vmatprep.subr.mxu0 0.0
      %740 = vmatpush1.msra.mxu0 0.0
      %741 = vmatprep.subr.mxu0 0.0
      %742 = vmatpush1.msra.mxu0 0.0
      %743 = vmatprep.subr.mxu0 0.0
      %744 = vmatpush1.msra.mxu0 0.0
      %745 = vmatprep.subr.mxu0 0.0
      %746 = vmatpush1.msra.mxu0 0.0
      %747 = vmatprep.subr.mxu0 0.0
      %748 = vmatpush1.msra.mxu0 0.0
      %749 = vmatprep.subr.mxu0 %v709
      %750 = vmatpush1.msra.mxu0 %v708
      %751 = vmatprep.subr.mxu0 %v705
      %752 = vmatpush1.msra.mxu0 %v704
      %753 = vmatprep.subr.mxu0 %v701
      %754 = vmatpush1.msra.mxu0 %v700
      %755 = vmatprep.subr.mxu0 %v697
      %756 = vmatpush1.msra.mxu0 %v696
      %757 = vmatprep.subr.mxu0 0.0
      %758 = vmatpush2.msra.mxu0 0.0
      %759 = vmatprep.subr.mxu0 0.0
      %760 = vmatpush2.msra.mxu0 0.0
      %761 = vmatprep.subr.mxu0 0.0
      %762 = vmatpush2.msra.mxu0 0.0
      %763 = vmatprep.subr.mxu0 0.0
      %764 = vmatpush2.msra.mxu0 0.0
      %765 = vmatprep.subr.mxu0 0.0
      %766 = vmatpush2.msra.mxu0 0.0
      %767 = vmatprep.subr.mxu0 0.0
      %768 = vmatpush2.msra.mxu0 0.0
      %769 = vmatprep.subr.mxu0 0.0
      %770 = vmatpush2.msra.mxu0 0.0
      %771 = vmatprep.subr.mxu0 0.0
      %772 = vmatpush2.msra.mxu0 0.0
      %773 = vmatprep.subr.mxu0 0.0
      %774 = vmatpush2.msra.mxu0 0.0
      %775 = vmatprep.subr.mxu0 0.0
      %776 = vmatpush2.msra.mxu0 0.0
      %777 = vmatprep.subr.mxu0 0.0
      %778 = vmatpush2.msra.mxu0 0.0
      %779 = vmatprep.subr.mxu0 0.0
      %780 = vmatpush2.msra.mxu0 0.0
      %781 = vmatprep.subr.mxu0 0.0
      %782 = vmatpush2.msra.mxu0 0.0
      %783 = vmatprep.subr.mxu0 0.0
      %784 = vmatpush2.msra.mxu0 0.0
      %785 = vmatprep.subr.mxu0 0.0
      %786 = vmatpush2.msra.mxu0 0.0
      %787 = vmatprep.subr.mxu0 0.0
      %788 = vmatpush2.msra.mxu0 0.0
      %789 = vmatprep.mubr.f32.mxu0 0.0
      %790 = vmatmul.mubr.f32.gmra.mxu0 %v714
      %v791 = vpop.f32.mrf.mxu0
      %v792 = vadd.f32 0.0, %v791
      %v793 = vpop.f32.mrf.mxu0
      %v794 = vadd.f32 0.0, %v793
      %795 = vmatprep.mubr.f32.mxu0 0.0
      %796 = vmatmul.mubr.f32.gmra.mxu0 %v717
      %v797 = vpop.f32.mrf.mxu0
      %v798 = vadd.f32 0.0, %v797
      %v799 = vpop.f32.mrf.mxu0
      %v800 = vadd.f32 0.0, %v799
      %801 = vmatprep.mubr.f32.mxu0 0.0
      %802 = vmatmul.mubr.f32.gmra.mxu0 %v720
      %v803 = vpop.f32.mrf.mxu0
      %v804 = vadd.f32 0.0, %v803
      %v805 = vpop.f32.mrf.mxu0
      %v806 = vadd.f32 0.0, %v805
      %807 = vmatprep.mubr.f32.mxu0 0.0
      %808 = vmatmul.mubr.f32.gmra.mxu0 %v723
      %v809 = vpop.f32.mrf.mxu0
      %v810 = vadd.f32 0.0, %v809
      %v811 = vpop.f32.mrf.mxu0
      %v812 = vadd.f32 0.0, %v811
      %813 = vdwg.mxu0
      %814 = vmatprep.subr.mxu0 0.0
      %815 = vmatpush1.msra.mxu0 0.0
      %816 = vmatprep.subr.mxu0 0.0
      %817 = vmatpush1.msra.mxu0 0.0
      %818 = vmatprep.subr.mxu0 0.0
      %819 = vmatpush1.msra.mxu0 0.0
      %820 = vmatprep.subr.mxu0 0.0
      %821 = vmatpush1.msra.mxu0 0.0
      %822 = vmatprep.subr.mxu0 0.0
      %823 = vmatpush1.msra.mxu0 0.0
      %824 = vmatprep.subr.mxu0 0.0
      %825 = vmatpush1.msra.mxu0 0.0
      %826 = vmatprep.subr.mxu0 0.0
      %827 = vmatpush1.msra.mxu0 0.0
      %828 = vmatprep.subr.mxu0 0.0
      %829 = vmatpush1.msra.mxu0 0.0
      %830 = vmatprep.subr.mxu0 0.0
      %831 = vmatpush1.msra.mxu0 0.0
      %832 = vmatprep.subr.mxu0 0.0
      %833 = vmatpush1.msra.mxu0 0.0
      %834 = vmatprep.subr.mxu0 0.0
      %835 = vmatpush1.msra.mxu0 0.0
      %836 = vmatprep.subr.mxu0 0.0
      %837 = vmatpush1.msra.mxu0 0.0
      %838 = vmatprep.subr.mxu0 %v711
      %839 = vmatpush1.msra.mxu0 %v710
      %840 = vmatprep.subr.mxu0 %v707
      %841 = vmatpush1.msra.mxu0 %v706
      %842 = vmatprep.subr.mxu0 %v703
      %843 = vmatpush1.msra.mxu0 %v702
      %844 = vmatprep.subr.mxu0 %v699
      %845 = vmatpush1.msra.mxu0 %v698
      %846 = vmatprep.subr.mxu0 0.0
      %847 = vmatpush2.msra.mxu0 0.0
      %848 = vmatprep.subr.mxu0 0.0
      %849 = vmatpush2.msra.mxu0 0.0
      %850 = vmatprep.subr.mxu0 0.0
      %851 = vmatpush2.msra.mxu0 0.0
      %852 = vmatprep.subr.mxu0 0.0
      %853 = vmatpush2.msra.mxu0 0.0
      %854 = vmatprep.subr.mxu0 0.0
      %855 = vmatpush2.msra.mxu0 0.0
      %856 = vmatprep.subr.mxu0 0.0
      %857 = vmatpush2.msra.mxu0 0.0
      %858 = vmatprep.subr.mxu0 0.0
      %859 = vmatpush2.msra.mxu0 0.0
      %860 = vmatprep.subr.mxu0 0.0
      %861 = vmatpush2.msra.mxu0 0.0
      %862 = vmatprep.subr.mxu0 0.0
      %863 = vmatpush2.msra.mxu0 0.0
      %864 = vmatprep.subr.mxu0 0.0
      %865 = vmatpush2.msra.mxu0 0.0
      %866 = vmatprep.subr.mxu0 0.0
      %867 = vmatpush2.msra.mxu0 0.0
      %868 = vmatprep.subr.mxu0 0.0
      %869 = vmatpush2.msra.mxu0 0.0
      %870 = vmatprep.subr.mxu0 0.0
      %871 = vmatpush2.msra.mxu0 0.0
      %872 = vmatprep.subr.mxu0 0.0
      %873 = vmatpush2.msra.mxu0 0.0
      %874 = vmatprep.subr.mxu0 0.0
      %875 = vmatpush2.msra.mxu0 0.0
      %876 = vmatprep.subr.mxu0 0.0
      %877 = vmatpush2.msra.mxu0 0.0
      %878 = vmatprep.mubr.f32.mxu0 0.0
      %879 = vmatmul.mubr.f32.gmra.mxu0 %v714
      %v880 = vpop.f32.mrf.mxu0
      %v881 = vadd.f32 0.0, %v880
      %v882 = vpop.f32.mrf.mxu0
      %v883 = vadd.f32 0.0, %v882
      %884 = vmatprep.mubr.f32.mxu0 0.0
      %885 = vmatmul.mubr.f32.gmra.mxu0 %v717
      %v886 = vpop.f32.mrf.mxu0
      %v887 = vadd.f32 0.0, %v886
      %v888 = vpop.f32.mrf.mxu0
      %v889 = vadd.f32 0.0, %v888
      %890 = vmatprep.mubr.f32.mxu0 0.0
      %891 = vmatmul.mubr.f32.gmra.mxu0 %v720
      %v892 = vpop.f32.mrf.mxu0
      %v893 = vadd.f32 0.0, %v892
      %v894 = vpop.f32.mrf.mxu0
      %v895 = vadd.f32 0.0, %v894
      %896 = vmatprep.mubr.f32.mxu0 0.0
      %897 = vmatmul.mubr.f32.gmra.mxu0 %v723
      %v898 = vpop.f32.mrf.mxu0
      %v899 = vadd.f32 0.0, %v898
      %v900 = vpop.f32.mrf.mxu0
      %v901 = vadd.f32 0.0, %v900
      %902 = vdwg.mxu0
      %v903 = vmul.f32 %v792, %v695
      %v904 = vmul.f32 %v794, %v695
      %v905 = vmul.f32 %v881, %v695
      %v906 = vmul.f32 %v883, %v695
      %v907 = vmul.f32 %v798, %v695
      %v908 = vmul.f32 %v800, %v695
      %v909 = vmul.f32 %v887, %v695
      %v910 = vmul.f32 %v889, %v695
      %v911 = vmul.f32 %v804, %v695
      %v912 = vmul.f32 %v806, %v695
      %v913 = vmul.f32 %v893, %v695
      %v914 = vmul.f32 %v895, %v695
      %v915 = vmul.f32 %v810, %v695
      %v916 = vmul.f32 %v812, %v695
      %v917 = vmul.f32 %v899, %v695
      %v918 = vmul.f32 %v901, %v695
      %v919 = vld [vmem:[%s4] sm:$0xff]
      %v920 = vld [vmem:[%s4 + $0x8] sm:$0xff]
      %v921 = vld [vmem:[%s4 + $0x10] sm:$0xff]
      %v922 = vld [vmem:[%s4 + $0x18] sm:$0xff]
      %v923 = vld [vmem:[%s4 + $0x20] sm:$0xff]
      %v924 = vld [vmem:[%s4 + $0x28] sm:$0xff]
      %v925 = vld [vmem:[%s4 + $0x30] sm:$0xff]
      %v926 = vld [vmem:[%s4 + $0x38] sm:$0xff]
      %v927 = vld [vmem:[%s4 + $0x40] sm:$0xff]
      %v928 = vld [vmem:[%s4 + $0x48] sm:$0xff]
      %v929 = vld [vmem:[%s4 + $0x50] sm:$0xff]
      %v930 = vld [vmem:[%s4 + $0x58] sm:$0xff]
      %v931 = vld [vmem:[%s4 + $0x60] sm:$0xff]
      %v932 = vld [vmem:[%s4 + $0x68] sm:$0xff]
      %v933 = vld [vmem:[%s4 + $0x70] sm:$0xff]
      %v934 = vld [vmem:[%s4 + $0x78] sm:$0xff]
      %v935 = vadd.f32 %v903, %v919
      %v936 = vadd.f32 %v904, %v920
      %v937 = vadd.f32 %v905, %v921
      %v938 = vadd.f32 %v906, %v922
      %v939 = vadd.f32 %v907, %v923
      %v940 = vadd.f32 %v908, %v924
      %v941 = vadd.f32 %v909, %v925
      %v942 = vadd.f32 %v910, %v926
      %v943 = vadd.f32 %v911, %v927
      %v944 = vadd.f32 %v912, %v928
      %v945 = vadd.f32 %v913, %v929
      %v946 = vadd.f32 %v914, %v930
      %v947 = vadd.f32 %v915, %v931
      %v948 = vadd.f32 %v916, %v932
      %v949 = vadd.f32 %v917, %v933
      %v950 = vadd.f32 %v918, %v934
      %v951 = vadd.f32 %v935, %v936
      %v952 = vadd.f32 %v951, %v937
      %v953 = vadd.f32 %v952, %v938
      %v954 = vadd.f32 %v953, %v939
      %v955 = vadd.f32 %v954, %v940
      %v956 = vadd.f32 %v955, %v941
      %v957 = vadd.f32 %v956, %v942
      %v958 = vadd.f32 %v957, %v943
      %v959 = vadd.f32 %v958, %v944
      %v960 = vadd.f32 %v959, %v945
      %v961 = vadd.f32 %v960, %v946
      %v962 = vadd.f32 %v961, %v947
      %v963 = vadd.f32 %v962, %v948
      %v964 = vadd.f32 %v963, %v949
      %v965 = vadd.f32 %v964, %v950
      %966 = vadd.xlane.f32.xlu0 %v965
      %v967 = vpop.xlane.xlu0 %966
      %v968 = vrot.slane %v967, 4
      %v969 = vadd.f32 %v967, %v968
      %v970 = vrot.slane %v969, 2
      %v971 = vadd.f32 %v969, %v970
      %v972 = vrot.slane %v971, 1
      %v973 = vadd.f32 %v971, %v972
      %s974 = vtos %v973
      %v975 = vstv %s974
      %v976 = vmul.f32 %v975, %v634
      %v977 = vsub.f32 %v935, %v976
      %v978 = vsub.f32 %v936, %v976
      %v979 = vsub.f32 %v937, %v976
      %v980 = vsub.f32 %v938, %v976
      %v981 = vsub.f32 %v939, %v976
      %v982 = vsub.f32 %v940, %v976
      %v983 = vsub.f32 %v941, %v976
      %v984 = vsub.f32 %v942, %v976
      %v985 = vsub.f32 %v943, %v976
      %v986 = vsub.f32 %v944, %v976
      %v987 = vsub.f32 %v945, %v976
      %v988 = vsub.f32 %v946, %v976
      %v989 = vsub.f32 %v947, %v976
      %v990 = vsub.f32 %v948, %v976
      %v991 = vsub.f32 %v949, %v976
      %v992 = vsub.f32 %v950, %v976
      %v993 = vmul.f32 %v977, %v977
      %v994 = vmul.f32 %v978, %v978
      %v995 = vmul.f32 %v979, %v979
      %v996 = vmul.f32 %v980, %v980
      %v997 = vmul.f32 %v981, %v981
      %v998 = vmul.f32 %v982, %v982
      %v999 = vmul.f32 %v983, %v983
      %v1000 = vmul.f32 %v984, %v984
      %v1001 = vmul.f32 %v985, %v985
      %v1002 = vmul.f32 %v986, %v986
      %v1003 = vmul.f32 %v987, %v987
      %v1004 = vmul.f32 %v988, %v988
      %v1005 = vmul.f32 %v989, %v989
      %v1006 = vmul.f32 %v990, %v990
      %v1007 = vmul.f32 %v991, %v991
      %v1008 = vmul.f32 %v992, %v992
      %v1009 = vadd.f32 %v993, %v994
      %v1010 = vadd.f32 %v1009, %v995
      %v1011 = vadd.f32 %v1010, %v996
      %v1012 = vadd.f32 %v1011, %v997
      %v1013 = vadd.f32 %v1012, %v998
      %v1014 = vadd.f32 %v1013, %v999
      %v1015 = vadd.f32 %v1014, %v1000
      %v1016 = vadd.f32 %v1015, %v1001
      %v1017 = vadd.f32 %v1016, %v1002
      %v1018 = vadd.f32 %v1017, %v1003
      %v1019 = vadd.f32 %v1018, %v1004
      %v1020 = vadd.f32 %v1019, %v1005
      %v1021 = vadd.f32 %v1020, %v1006
      %v1022 = vadd.f32 %v1021, %v1007
      %v1023 = vadd.f32 %v1022, %v1008
      %1024 = vadd.xlane.f32.xlu0 %v1023
      %v1025 = vpop.xlane.xlu0 %1024
      %v1026 = vrot.slane %v1025, 4
      %v1027 = vadd.f32 %v1025, %v1026
      %v1028 = vrot.slane %v1027, 2
      %v1029 = vadd.f32 %v1027, %v1028
      %v1030 = vrot.slane %v1029, 1
      %v1031 = vadd.f32 %v1029, %v1030
      %s1032 = vtos %v1031
      %v1033 = vstv %s1032
      %v1034 = vmul.f32 %v1033, %v634
      %v1035 = vadd.f32 %v1034, 1e-05
      %v1036 = vrsqrt.pop %v1035
      %v1037 = vmul.f32 %v977, %v1036
      %v1038 = vmul.f32 %v978, %v1036
      %v1039 = vmul.f32 %v979, %v1036
      %v1040 = vmul.f32 %v980, %v1036
      %v1041 = vmul.f32 %v981, %v1036
      %v1042 = vmul.f32 %v982, %v1036
      %v1043 = vmul.f32 %v983, %v1036
      %v1044 = vmul.f32 %v984, %v1036
      %v1045 = vmul.f32 %v985, %v1036
      %v1046 = vmul.f32 %v986, %v1036
      %v1047 = vmul.f32 %v987, %v1036
      %v1048 = vmul.f32 %v988, %v1036
      %v1049 = vmul.f32 %v989, %v1036
      %v1050 = vmul.f32 %v990, %v1036
      %v1051 = vmul.f32 %v991, %v1036
      %v1052 = vmul.f32 %v992, %v1036
      %1053 = vst [vmem:[%s224] sm:$0xff] %v1037
      %1054 = vst [vmem:[%s224 + $0x8] sm:$0xff] %v1038
      %1055 = vst [vmem:[%s224 + $0x10] sm:$0xff] %v1039
      %1056 = vst [vmem:[%s224 + $0x18] sm:$0xff] %v1040
      %1057 = vst [vmem:[%s224 + $0x20] sm:$0xff] %v1041
      %1058 = vst [vmem:[%s224 + $0x28] sm:$0xff] %v1042
      %1059 = vst [vmem:[%s224 + $0x30] sm:$0xff] %v1043
      %1060 = vst [vmem:[%s224 + $0x38] sm:$0xff] %v1044
      %1061 = vst [vmem:[%s224 + $0x40] sm:$0xff] %v1045
      %1062 = vst [vmem:[%s224 + $0x48] sm:$0xff] %v1046
      %1063 = vst [vmem:[%s224 + $0x50] sm:$0xff] %v1047
      %1064 = vst [vmem:[%s224 + $0x58] sm:$0xff] %v1048
      %1065 = vst [vmem:[%s224 + $0x60] sm:$0xff] %v1049
      %1066 = vst [vmem:[%s224 + $0x68] sm:$0xff] %v1050
      %1067 = vst [vmem:[%s224 + $0x70] sm:$0xff] %v1051
      %1068 = vst [vmem:[%s224 + $0x78] sm:$0xff] %v1052
      %p1069 = scmp.lt.s32.totalorder %s16, 1
      %s1070 = scalar_select %p1069, %s16, 1
      %s1071 = smul.addr %s1070, 16
      %s1072 = smul.addr %s1071, 8
      %s1073 = scalar_lea.vmem %s5, %s1072
      // Predicated region
      $region41: #{positional_encoding_3d.1} parent=39 // pred_check
        %p1074 = pneg %p144
      $region42: #{positional_encoding_3d.1} parent=39 // pred_check_branch
        %1076 = sbr.rel (%p1074) target = $region44
      $region43: #{positional_encoding_3d.1} parent=39 // pred_region
        _
      $region44: #{positional_encoding_3d.1} parent=39 // pred_fallthru
        _
    $region40: #{positional_encoding_3d.1} parent=5 // pred_fallthru
      _
    %p1077 = scmp.le.s32.totalorder 2, %s11
    // Predicated region
    $region45: #{positional_encoding_3d.1} parent=5 // pred_check
      %p1078 = pneg %p1077
    $region46: #{positional_encoding_3d.1} parent=5 // pred_check_branch
      %1080 = sbr.rel (%p1078) target = $region48
    $region47: #{positional_encoding_3d.1} parent=5 // pred_region
      %s1081 = ssub.s32 %s11, 2
      // Predicated region
      $region49: #{positional_encoding_3d.1} parent=47 // pred_check
        %p1082 = pneg %p150
      $region50: #{positional_encoding_3d.1} parent=47 // pred_check_branch
        %1084 = sbr.rel (%p1082) target = $region52
      $region51: #{positional_encoding_3d.1} parent=47 // pred_region
        %p1085 = scmp.lt.s32.totalorder %s17, 1
        %s1086 = scalar_select %p1085, %s17, 1
        %s1087 = smul.addr %s1086, 16
        %s1088 = smul.addr %s1087, 8
        %s1089 = scalar_lea.vmem %s5, %s1088
      $region52: #{positional_encoding_3d.1} parent=47 // pred_fallthru
        _
    $region48: #{positional_encoding_3d.1} parent=5 // pred_fallthru
      _
  $region6: #{positional_encoding_3d.1} parent=0 // loop_footer
    %s15 = sadd.s32 1, %s11
  $region7: #{positional_encoding_3d.1} parent=0 // loop_footer_branch
    %10 = sbr.rel target = $region3
  $region8: #{positional_encoding_3d.1} parent=0 // loop_exit
    _

</llo_original>
